<compile_context>
chip_gen: v6e
topology: v6e:2x2x1
jax: 0.10.0
libtpu: 0.0.40
codegen_flags: <defaults>
</compile_context>

<pallas_src>
import jax
import jax.numpy as jnp
import numpy as np
from jax.experimental import pallas as pl
from jax.experimental.pallas import tpu as pltpu

_LANES = 128
_SUBLANES = 8


def _round_up(x, m):
    return ((x + m - 1) // m) * m


def _sublane_gran(dtype):
    """Min row granularity for a native-dtype (rows,128) block: 8 f32, 16 bf16, 32 int8/fp8."""
    itemsize = np.dtype(dtype).itemsize
    return _SUBLANES * max(1, 4 // itemsize)


def _detect_num_tensorcores():
    """Only v7x-class chips expose 2 TensorCores per chip; everything else is 1."""
    try:
        kind = jax.devices()[0].device_kind.lower()
    except Exception:
        return 1
    return 2 if "7" in kind else 1


_NUM_TC = _detect_num_tensorcores()
_CORE_PARALLEL = getattr(pltpu, "CORE_PARALLEL", "parallel")


# ---------------------------------------------------------------------------
# Tiled reduction kernel (full-resolution pair; also the large-input fallback).
# ---------------------------------------------------------------------------
def _make_bce_sum_kernel(n_preds, tile_rows, steps_per_chunk, valid_rows, needs_mask):
    """Accumulate per-(sublane,lane) partial sums of elementwise
    t*log(p) + (1-t)*log(1-p)  (positive form; negated later) for n_preds
    predictions sharing one target tile."""

    def kernel(*refs):
        pred_refs = refs[:n_preds]
        targ_ref = refs[n_preds]
        out_ref = refs[n_preds + 1]

        @pl.when(pl.program_id(1) == 0)
        def _init():
            out_ref[...] = jnp.zeros_like(out_ref)

        t = targ_ref[...].astype(jnp.float32)

        if needs_mask:
            row_off = (pl.program_id(0) * steps_per_chunk + pl.program_id(1)) * tile_rows
            row_ids = jax.lax.broadcasted_iota(jnp.int32, (tile_rows, _LANES), 0) + row_off
            mask = row_ids < valid_rows

        for i, pred_ref in enumerate(pred_refs):
            p = pred_ref[...].astype(jnp.float32)
            # Clamp BEFORE the multiply (torch semantics); also makes any zero padding
            # (p=0, t=0) contribute exactly 0:  0*(-100-0) + 0 = 0.
            log_p = jnp.maximum(jnp.log(p), -100.0)
            log_1mp = jnp.maximum(jnp.log(1.0 - p), -100.0)
            contrib = t * (log_p - log_1mp) + log_1mp          # (tile_rows, 128) f32
            if needs_mask:
                # where (not multiply) so garbage in overhanging rows can never leak
                # NaN/Inf into the accumulator.
                contrib = jnp.where(mask, contrib, 0.0)
            # Fold rows into the (8, 128) accumulator: pure VPU vreg adds,
            # no cross-lane (XLU) work in the inner loop.
            out_ref[i, ...] += contrib.reshape(
                tile_rows // _SUBLANES, _SUBLANES, _LANES).sum(axis=0)

    return kernel


def _to_rows128(x):
    """View the array as a lane-dense (rows, 128) slab (pad only if length % 128 != 0)."""
    flat = x.reshape(-1)
    n = flat.shape[0]
    rows = -(-n // _LANES)
    if rows * _LANES != n:
        # TODO(synk): flat lengths not a multiple of 128 force a small jnp.pad copy;
        # a per-lane tail mask in-kernel would avoid even this.
        flat = jnp.pad(flat, (0, rows * _LANES - n))
    return flat.reshape(rows, _LANES)


def _bce_sums(preds, target, *, max_tile_rows=1024):
    """Summed elementwise t*log(p)+(1-t)*log(1-p) (clamped at -100) for each prediction
    against the shared target.  Returns f32 vector of shape (len(preds),)."""
    n_preds = len(preds)
    n_elem = int(np.prod(target.shape))

    inputs2d = [_to_rows128(x) for x in list(preds) + [target]]
    rows = inputs2d[0].shape[0]

    gran = max(_sublane_gran(x.dtype) for x in inputs2d)
    tile_rows = min(_round_up(max_tile_rows, gran), _round_up(rows, gran))
    steps = -(-rows // tile_rows)

    n_chunks = 2 if (_NUM_TC >= 2 and steps >= 2) else 1
    steps_per_chunk = -(-steps // n_chunks)
    needs_mask = (n_chunks * steps_per_chunk * tile_rows) != rows

    def in_index_map(c, k):
        return (c * steps_per_chunk + k, 0)

    in_specs = [pl.BlockSpec((tile_rows, _LANES), in_index_map)
                for _ in range(n_preds + 1)]
    out_specs = pl.BlockSpec((pl.Squeezed(), n_preds, _SUBLANES, _LANES),
                             lambda c, k: (c, 0, 0, 0))

    chunk_sem = _CORE_PARALLEL if n_chunks > 1 else "arbitrary"
    bytes_in = sum(int(np.prod(x.shape)) * np.dtype(x.dtype).itemsize for x in inputs2d)

    partial = pl.pallas_call(
        _make_bce_sum_kernel(n_preds, tile_rows, steps_per_chunk, rows, needs_mask),
        grid=(n_chunks, steps_per_chunk),
        in_specs=in_specs,
        out_specs=out_specs,
        out_shape=jax.ShapeDtypeStruct(
            (n_chunks, n_preds, _SUBLANES, _LANES), jnp.float32),
        compiler_params=pltpu.CompilerParams(
            dimension_semantics=(chunk_sem, "arbitrary")),
        cost_estimate=pl.CostEstimate(
            flops=5 * n_preds * n_elem,
            transcendentals=2 * n_preds * n_elem,
            bytes_accessed=bytes_in + n_chunks * n_preds * _SUBLANES * _LANES * 4),
    )(*inputs2d)

    # Tiny final cross-chunk / cross-lane reduction in plain JAX.
    return partial.sum(axis=(0, 2, 3))  # (n_preds,)


# ---------------------------------------------------------------------------
# Fused low-resolution kernel: all 4 small (pred, target) pairs in one dispatch.
# ---------------------------------------------------------------------------
def _make_lowres_kernel(n_levels):
    def kernel(*refs):
        out_ref = refs[-1]
        for i in range(n_levels):
            p = refs[2 * i][...].astype(jnp.float32)
            t = refs[2 * i + 1][...].astype(jnp.float32)
            log_p = jnp.maximum(jnp.log(p), -100.0)
            log_1mp = jnp.maximum(jnp.log(1.0 - p), -100.0)
            contrib = t * (log_p - log_1mp) + log_1mp
            s = jnp.sum(contrib, axis=1, keepdims=True)
            s = jnp.sum(s, axis=0, keepdims=True)              # (1, 1)
            out_ref[i, :, :] = jnp.broadcast_to(s, (_SUBLANES, _LANES))
    return kernel


def _lowres_fused_ok(pairs, limit_bytes=8 * 2 ** 20):
    total = 0
    for p, t in pairs:
        total += p.size * np.dtype(p.dtype).itemsize + t.size * np.dtype(t.dtype).itemsize
    return total <= limit_bytes


def _bce_sums_lowres_fused(pairs):
    """One pallas_call for all (pred, target) low-res pairs; returns (n_levels,) sums."""
    n_levels = len(pairs)
    flat_inputs = []
    in_specs = []
    for p, t in pairs:
        for x in (p, t):
            x2 = x.reshape(-1, x.shape[-1])                    # (B*C*h, w), full block
            flat_inputs.append(x2)
            in_specs.append(pl.BlockSpec(x2.shape, lambda i: (0, 0)))

    partial = pl.pallas_call(
        _make_lowres_kernel(n_levels),
        grid=(1,),
        in_specs=in_specs,
        out_specs=pl.BlockSpec((n_levels, _SUBLANES, _LANES), lambda i: (0, 0, 0)),
        out_shape=jax.ShapeDtypeStruct((n_levels, _SUBLANES, _LANES), jnp.float32),
    )(*flat_inputs)
    return partial[:, 0, 0]                                    # (n_levels,)


# ---------------------------------------------------------------------------
# Loss wrapper.
# ---------------------------------------------------------------------------
def _maxpool2x2(x):
    b, c, h, w = x.shape
    return x.reshape(b, c, h // 2, 2, w // 2, 2).max(axis=(3, 5))


@jax.jit
def edge_bce_loss(gt_pre, out, target):
    """gt_pre = (gt_pre5, gt_pre4, gt_pre3, gt_pre2, gt_pre1); out/target: (B,C,H,W)."""
    gt_pre5, gt_pre4, gt_pre3, gt_pre2, gt_pre1 = gt_pre

    # Hierarchical max-pool of the target (kernel=stride 2, 4, 8, 16) in plain JAX.
    t1 = target
    t2 = _maxpool2x2(t1)
    t3 = _maxpool2x2(t2)
    t4 = _maxpool2x2(t3)
    t5 = _maxpool2x2(t4)

    # Full-resolution pair (out, gt_pre1) shares one kernel / one target read.
    s_full = _bce_sums([out, gt_pre1], t1)                     # (2,) positive sums

    low_pairs = [(gt_pre2, t2), (gt_pre3, t3), (gt_pre4, t4), (gt_pre5, t5)]
    if _lowres_fused_ok(low_pairs):
        s_low = _bce_sums_lowres_fused(low_pairs)              # (4,) positive sums
    else:
        s_low = jnp.stack([_bce_sums([p], t)[0] for p, t in low_pairs])

    def mean_loss(s, shape, w):
        # BCE mean = -(sum of positive form) / count
        return (-s / jnp.float32(int(np.prod(shape)))) * w

    return (mean_loss(s_full[0], t1.shape, 1.0)
            + mean_loss(s_full[1], t1.shape, 0.5)
            + mean_loss(s_low[0], t2.shape, 0.4)
            + mean_loss(s_low[1], t3.shape, 0.3)
            + mean_loss(s_low[2], t4.shape, 0.2)
            + mean_loss(s_low[3], t5.shape, 0.1))


def _reference_loss(gt_pre, out, target):
    """Pure-JAX mirror of the PyTorch edge_BceLoss module."""

    def bce_mean(pred, targ):
        p = pred.astype(jnp.float32)
        t = targ.astype(jnp.float32)
        lp = jnp.maximum(jnp.log(p), -100.0)
        l1p = jnp.maximum(jnp.log(1.0 - p), -100.0)
        return jnp.mean(-(t * lp + (1.0 - t) * l1p))

    def maxpool(x, k):
        b, c, h, w = x.shape
        return x.reshape(b, c, h // k, k, w // k, k).max(axis=(3, 5))

    g5, g4, g3, g2, g1 = gt_pre
    gt_loss = (bce_mean(g5, maxpool(target, 16)) * 0.1
               + bce_mean(g4, maxpool(target, 8)) * 0.2
               + bce_mean(g3, maxpool(target, 4)) * 0.3
               + bce_mean(g2, maxpool(target, 2)) * 0.4
               + bce_mean(g1, target) * 0.5)
    return bce_mean(out, target) + gt_loss


if __name__ == "__main__":
    key = jax.random.PRNGKey(0)
    B, C, H, W = 2, 1, 16, 16
    keys = jax.random.split(key, 8)

    # Predictions are probabilities (BCELoss expects sigmoid-ed inputs).
    out = jax.nn.sigmoid(jax.random.normal(keys[0], (B, C, H, W), jnp.float32))
    factors = (16, 8, 4, 2, 1)  # gt_pre5 ... gt_pre1 spatial down-sample factors
    gt_pre = tuple(
        jax.nn.sigmoid(
            jax.random.normal(keys[i + 1], (B, C, H // f, W // f), jnp.float32))
        for i, f in enumerate(factors)
    )
    target = (jax.random.uniform(keys[6], (B, C, H, W)) > 0.5).astype(jnp.float32)

    loss = edge_bce_loss(gt_pre, out, target)
    loss = jax.block_until_ready(loss)

    ref = _reference_loss(gt_pre, out, target)
    np.testing.assert_allclose(np.asarray(loss), np.asarray(ref),
                               rtol=1e-5, atol=1e-5)

    print("KERNEL_OK")
</pallas_src>

<mosaic_0001>
module attributes {stable_mosaic.version = 11 : i64} {
  func.func @kernel(%arg0: i32, %arg1: memref<16x8xf32, #tpu.memory_space<vmem>>, %arg2: memref<16x8xf32, #tpu.memory_space<vmem>>, %arg3: memref<8x4xf32, #tpu.memory_space<vmem>>, %arg4: memref<8x4xf32, #tpu.memory_space<vmem>>, %arg5: memref<4x2xf32, #tpu.memory_space<vmem>>, %arg6: memref<4x2xf32, #tpu.memory_space<vmem>>, %arg7: memref<2x1xf32, #tpu.memory_space<vmem>>, %arg8: memref<2x1xf32, #tpu.memory_space<vmem>>, %arg9: memref<4x8x128xf32, #tpu.memory_space<vmem>>) attributes {dimension_semantics = [#tpu.dimension_semantics<arbitrary>], iteration_bounds = array<i64: 1>, scalar_prefetch = 0 : i64, scratch_operands = 0 : i64, tpu.core_type = #tpu.core_type<tc>, window_params = [{pipeline_mode = #tpu.pipeline_mode<synchronous>, transform_indices = @transform_0, window_bounds = array<i64: 16, 8>}, {pipeline_mode = #tpu.pipeline_mode<synchronous>, transform_indices = @transform_1, window_bounds = array<i64: 16, 8>}, {pipeline_mode = #tpu.pipeline_mode<synchronous>, transform_indices = @transform_2, window_bounds = array<i64: 8, 4>}, {pipeline_mode = #tpu.pipeline_mode<synchronous>, transform_indices = @transform_3, window_bounds = array<i64: 8, 4>}, {pipeline_mode = #tpu.pipeline_mode<synchronous>, transform_indices = @transform_4, window_bounds = array<i64: 4, 2>}, {pipeline_mode = #tpu.pipeline_mode<synchronous>, transform_indices = @transform_5, window_bounds = array<i64: 4, 2>}, {pipeline_mode = #tpu.pipeline_mode<synchronous>, transform_indices = @transform_6, window_bounds = array<i64: 2, 1>}, {pipeline_mode = #tpu.pipeline_mode<synchronous>, transform_indices = @transform_7, window_bounds = array<i64: 2, 1>}, {pipeline_mode = #tpu.pipeline_mode<synchronous>, transform_indices = @transform_8, window_bounds = array<i64: 4, 8, 128>}]} {
    %c0 = arith.constant 0 : index
    %c0_0 = arith.constant 0 : index
    %0 = vector.load %arg1[%c0, %c0_0] : memref<16x8xf32, #tpu.memory_space<vmem>>, vector<16x8xf32>
    %c0_1 = arith.constant 0 : index
    %c0_2 = arith.constant 0 : index
    %1 = vector.load %arg2[%c0_1, %c0_2] : memref<16x8xf32, #tpu.memory_space<vmem>>, vector<16x8xf32>
    %2 = math.log %0 : vector<16x8xf32>
    %cst = arith.constant -1.000000e+02 : f32
    %3 = vector.broadcast %cst : f32 to vector<16x8xf32>
    %4 = arith.maximumf %2, %3 : vector<16x8xf32>
    %cst_3 = arith.constant 1.000000e+00 : f32
    %5 = vector.broadcast %cst_3 : f32 to vector<16x8xf32>
    %6 = arith.subf %5, %0 : vector<16x8xf32>
    %7 = math.log %6 : vector<16x8xf32>
    %cst_4 = arith.constant -1.000000e+02 : f32
    %8 = vector.broadcast %cst_4 : f32 to vector<16x8xf32>
    %9 = arith.maximumf %7, %8 : vector<16x8xf32>
    %10 = arith.subf %4, %9 : vector<16x8xf32>
    %11 = arith.mulf %1, %10 : vector<16x8xf32>
    %12 = arith.addf %11, %9 : vector<16x8xf32>
    %cst_5 = arith.constant dense<0.000000e+00> : vector<16xf32>
    %13 = vector.multi_reduction <add>, %12, %cst_5 [1] : vector<16x8xf32> to vector<16xf32>
    %14 = vector.shape_cast %13 : vector<16xf32> to vector<16x1xf32>
    %cst_6 = arith.constant dense<0.000000e+00> : vector<1xf32>
    %15 = vector.multi_reduction <add>, %14, %cst_6 [0] : vector<16x1xf32> to vector<1xf32>
    %16 = vector.shape_cast %15 : vector<1xf32> to vector<1x1xf32>
    %17 = vector.shape_cast %16 : vector<1x1xf32> to vector<1x1xf32>
    %18 = vector.broadcast %17 : vector<1x1xf32> to vector<8x128xf32>
    %c0_7 = arith.constant 0 : index
    %c0_8 = arith.constant 0 : index
    %c0_9 = arith.constant 0 : index
    %19 = vector.load %arg9[%c0_7, %c0_8, %c0_9] : memref<4x8x128xf32, #tpu.memory_space<vmem>>, vector<1x8x128xf32>
    %20 = vector.shape_cast %19 : vector<1x8x128xf32> to vector<8x128xf32>
    %21 = vector.shape_cast %18 : vector<8x128xf32> to vector<1x8x128xf32>
    tpu.vector_store %arg9[%c0_7, %c0_8, %c0_9], %21 {strides = array<i32>} : memref<4x8x128xf32, #tpu.memory_space<vmem>>, vector<1x8x128xf32>,
    %c0_10 = arith.constant 0 : index
    %c0_11 = arith.constant 0 : index
    %22 = vector.load %arg3[%c0_10, %c0_11] : memref<8x4xf32, #tpu.memory_space<vmem>>, vector<8x4xf32>
    %c0_12 = arith.constant 0 : index
    %c0_13 = arith.constant 0 : index
    %23 = vector.load %arg4[%c0_12, %c0_13] : memref<8x4xf32, #tpu.memory_space<vmem>>, vector<8x4xf32>
    %24 = math.log %22 : vector<8x4xf32>
    %cst_14 = arith.constant -1.000000e+02 : f32
    %25 = vector.broadcast %cst_14 : f32 to vector<8x4xf32>
    %26 = arith.maximumf %24, %25 : vector<8x4xf32>
    %cst_15 = arith.constant 1.000000e+00 : f32
    %27 = vector.broadcast %cst_15 : f32 to vector<8x4xf32>
    %28 = arith.subf %27, %22 : vector<8x4xf32>
    %29 = math.log %28 : vector<8x4xf32>
    %cst_16 = arith.constant -1.000000e+02 : f32
    %30 = vector.broadcast %cst_16 : f32 to vector<8x4xf32>
    %31 = arith.maximumf %29, %30 : vector<8x4xf32>
    %32 = arith.subf %26, %31 : vector<8x4xf32>
    %33 = arith.mulf %23, %32 : vector<8x4xf32>
    %34 = arith.addf %33, %31 : vector<8x4xf32>
    %cst_17 = arith.constant dense<0.000000e+00> : vector<8xf32>
    %35 = vector.multi_reduction <add>, %34, %cst_17 [1] : vector<8x4xf32> to vector<8xf32>
    %36 = vector.shape_cast %35 : vector<8xf32> to vector<8x1xf32>
    %cst_18 = arith.constant dense<0.000000e+00> : vector<1xf32>
    %37 = vector.multi_reduction <add>, %36, %cst_18 [0] : vector<8x1xf32> to vector<1xf32>
    %38 = vector.shape_cast %37 : vector<1xf32> to vector<1x1xf32>
    %39 = vector.shape_cast %38 : vector<1x1xf32> to vector<1x1xf32>
    %40 = vector.broadcast %39 : vector<1x1xf32> to vector<8x128xf32>
    %c1 = arith.constant 1 : index
    %c0_19 = arith.constant 0 : index
    %c0_20 = arith.constant 0 : index
    %41 = vector.load %arg9[%c1, %c0_19, %c0_20] : memref<4x8x128xf32, #tpu.memory_space<vmem>>, vector<1x8x128xf32>
    %42 = vector.shape_cast %41 : vector<1x8x128xf32> to vector<8x128xf32>
    %43 = vector.shape_cast %40 : vector<8x128xf32> to vector<1x8x128xf32>
    tpu.vector_store %arg9[%c1, %c0_19, %c0_20], %43 {strides = array<i32>} : memref<4x8x128xf32, #tpu.memory_space<vmem>>, vector<1x8x128xf32>,
    %c0_21 = arith.constant 0 : index
    %c0_22 = arith.constant 0 : index
    %44 = vector.load %arg5[%c0_21, %c0_22] : memref<4x2xf32, #tpu.memory_space<vmem>>, vector<4x2xf32>
    %c0_23 = arith.constant 0 : index
    %c0_24 = arith.constant 0 : index
    %45 = vector.load %arg6[%c0_23, %c0_24] : memref<4x2xf32, #tpu.memory_space<vmem>>, vector<4x2xf32>
    %46 = math.log %44 : vector<4x2xf32>
    %cst_25 = arith.constant -1.000000e+02 : f32
    %47 = vector.broadcast %cst_25 : f32 to vector<4x2xf32>
    %48 = arith.maximumf %46, %47 : vector<4x2xf32>
    %cst_26 = arith.constant 1.000000e+00 : f32
    %49 = vector.broadcast %cst_26 : f32 to vector<4x2xf32>
    %50 = arith.subf %49, %44 : vector<4x2xf32>
    %51 = math.log %50 : vector<4x2xf32>
    %cst_27 = arith.constant -1.000000e+02 : f32
    %52 = vector.broadcast %cst_27 : f32 to vector<4x2xf32>
    %53 = arith.maximumf %51, %52 : vector<4x2xf32>
    %54 = arith.subf %48, %53 : vector<4x2xf32>
    %55 = arith.mulf %45, %54 : vector<4x2xf32>
    %56 = arith.addf %55, %53 : vector<4x2xf32>
    %cst_28 = arith.constant dense<0.000000e+00> : vector<4xf32>
    %57 = vector.multi_reduction <add>, %56, %cst_28 [1] : vector<4x2xf32> to vector<4xf32>
    %58 = vector.shape_cast %57 : vector<4xf32> to vector<4x1xf32>
    %cst_29 = arith.constant dense<0.000000e+00> : vector<1xf32>
    %59 = vector.multi_reduction <add>, %58, %cst_29 [0] : vector<4x1xf32> to vector<1xf32>
    %60 = vector.shape_cast %59 : vector<1xf32> to vector<1x1xf32>
    %61 = vector.shape_cast %60 : vector<1x1xf32> to vector<1x1xf32>
    %62 = vector.broadcast %61 : vector<1x1xf32> to vector<8x128xf32>
    %c2 = arith.constant 2 : index
    %c0_30 = arith.constant 0 : index
    %c0_31 = arith.constant 0 : index
    %63 = vector.load %arg9[%c2, %c0_30, %c0_31] : memref<4x8x128xf32, #tpu.memory_space<vmem>>, vector<1x8x128xf32>
    %64 = vector.shape_cast %63 : vector<1x8x128xf32> to vector<8x128xf32>
    %65 = vector.shape_cast %62 : vector<8x128xf32> to vector<1x8x128xf32>
    tpu.vector_store %arg9[%c2, %c0_30, %c0_31], %65 {strides = array<i32>} : memref<4x8x128xf32, #tpu.memory_space<vmem>>, vector<1x8x128xf32>,
    %c0_32 = arith.constant 0 : index
    %c0_33 = arith.constant 0 : index
    %66 = vector.load %arg7[%c0_32, %c0_33] : memref<2x1xf32, #tpu.memory_space<vmem>>, vector<2x1xf32>
    %c0_34 = arith.constant 0 : index
    %c0_35 = arith.constant 0 : index
    %67 = vector.load %arg8[%c0_34, %c0_35] : memref<2x1xf32, #tpu.memory_space<vmem>>, vector<2x1xf32>
    %68 = math.log %66 : vector<2x1xf32>
    %cst_36 = arith.constant -1.000000e+02 : f32
    %69 = vector.broadcast %cst_36 : f32 to vector<2x1xf32>
    %70 = arith.maximumf %68, %69 : vector<2x1xf32>
    %cst_37 = arith.constant 1.000000e+00 : f32
    %71 = vector.broadcast %cst_37 : f32 to vector<2x1xf32>
    %72 = arith.subf %71, %66 : vector<2x1xf32>
    %73 = math.log %72 : vector<2x1xf32>
    %cst_38 = arith.constant -1.000000e+02 : f32
    %74 = vector.broadcast %cst_38 : f32 to vector<2x1xf32>
    %75 = arith.maximumf %73, %74 : vector<2x1xf32>
    %76 = arith.subf %70, %75 : vector<2x1xf32>
    %77 = arith.mulf %67, %76 : vector<2x1xf32>
    %78 = arith.addf %77, %75 : vector<2x1xf32>
    %cst_39 = arith.constant dense<0.000000e+00> : vector<2xf32>
    %79 = vector.multi_reduction <add>, %78, %cst_39 [1] : vector<2x1xf32> to vector<2xf32>
    %80 = vector.shape_cast %79 : vector<2xf32> to vector<2x1xf32>
    %cst_40 = arith.constant dense<0.000000e+00> : vector<1xf32>
    %81 = vector.multi_reduction <add>, %80, %cst_40 [0] : vector<2x1xf32> to vector<1xf32>
    %82 = vector.shape_cast %81 : vector<1xf32> to vector<1x1xf32>
    %83 = vector.shape_cast %82 : vector<1x1xf32> to vector<1x1xf32>
    %84 = vector.broadcast %83 : vector<1x1xf32> to vector<8x128xf32>
    %c3 = arith.constant 3 : index
    %c0_41 = arith.constant 0 : index
    %c0_42 = arith.constant 0 : index
    %85 = vector.load %arg9[%c3, %c0_41, %c0_42] : memref<4x8x128xf32, #tpu.memory_space<vmem>>, vector<1x8x128xf32>
    %86 = vector.shape_cast %85 : vector<1x8x128xf32> to vector<8x128xf32>
    %87 = vector.shape_cast %84 : vector<8x128xf32> to vector<1x8x128xf32>
    tpu.vector_store %arg9[%c3, %c0_41, %c0_42], %87 {strides = array<i32>} : memref<4x8x128xf32, #tpu.memory_space<vmem>>, vector<1x8x128xf32>,
    return
  }
  func.func @transform_0(%arg0: i32) -> (i32, i32) {
    %c0_i32 = arith.constant 0 : i32
    %c0_i32_0 = arith.constant 0 : i32
    %c0_i32_1 = arith.constant 0 : i32
    return %c0_i32, %c0_i32_0 : i32, i32
  }
  func.func @transform_1(%arg0: i32) -> (i32, i32) {
    %c0_i32 = arith.constant 0 : i32
    %c0_i32_0 = arith.constant 0 : i32
    %c0_i32_1 = arith.constant 0 : i32
    return %c0_i32, %c0_i32_0 : i32, i32
  }
  func.func @transform_2(%arg0: i32) -> (i32, i32) {
    %c0_i32 = arith.constant 0 : i32
    %c0_i32_0 = arith.constant 0 : i32
    %c0_i32_1 = arith.constant 0 : i32
    return %c0_i32, %c0_i32_0 : i32, i32
  }
  func.func @transform_3(%arg0: i32) -> (i32, i32) {
    %c0_i32 = arith.constant 0 : i32
    %c0_i32_0 = arith.constant 0 : i32
    %c0_i32_1 = arith.constant 0 : i32
    return %c0_i32, %c0_i32_0 : i32, i32
  }
  func.func @transform_4(%arg0: i32) -> (i32, i32) {
    %c0_i32 = arith.constant 0 : i32
    %c0_i32_0 = arith.constant 0 : i32
    %c0_i32_1 = arith.constant 0 : i32
    return %c0_i32, %c0_i32_0 : i32, i32
  }
  func.func @transform_5(%arg0: i32) -> (i32, i32) {
    %c0_i32 = arith.constant 0 : i32
    %c0_i32_0 = arith.constant 0 : i32
    %c0_i32_1 = arith.constant 0 : i32
    return %c0_i32, %c0_i32_0 : i32, i32
  }
  func.func @transform_6(%arg0: i32) -> (i32, i32) {
    %c0_i32 = arith.constant 0 : i32
    %c0_i32_0 = arith.constant 0 : i32
    %c0_i32_1 = arith.constant 0 : i32
    return %c0_i32, %c0_i32_0 : i32, i32
  }
  func.func @transform_7(%arg0: i32) -> (i32, i32) {
    %c0_i32 = arith.constant 0 : i32
    %c0_i32_0 = arith.constant 0 : i32
    %c0_i32_1 = arith.constant 0 : i32
    return %c0_i32, %c0_i32_0 : i32, i32
  }
  func.func @transform_8(%arg0: i32) -> (i32, i32, i32) {
    %c0_i32 = arith.constant 0 : i32
    %c0_i32_0 = arith.constant 0 : i32
    %c0_i32_1 = arith.constant 0 : i32
    %c0_i32_2 = arith.constant 0 : i32
    return %c0_i32, %c0_i32_0, %c0_i32_1 : i32, i32, i32
  }
}

module attributes {stable_mosaic.version = 11 : i64} {
  func.func @kernel(%arg0: i32, %arg1: i32, %arg2: memref<8x128xf32, #tpu.memory_space<vmem>>, %arg3: memref<8x128xf32, #tpu.memory_space<vmem>>, %arg4: memref<8x128xf32, #tpu.memory_space<vmem>>, %arg5: memref<1x2x8x128xf32, #tpu.memory_space<vmem>>) attributes {dimension_semantics = [#tpu.dimension_semantics<arbitrary>, #tpu.dimension_semantics<arbitrary>], iteration_bounds = array<i64: 1, 1>, scalar_prefetch = 0 : i64, scratch_operands = 0 : i64, tpu.core_type = #tpu.core_type<tc>, window_params = [{transform_indices = @transform_0, window_bounds = array<i64: 8, 128>}, {transform_indices = @transform_1, window_bounds = array<i64: 8, 128>}, {transform_indices = @transform_2, window_bounds = array<i64: 8, 128>}, {transform_indices = @transform_3, window_bounds = array<i64: 1, 2, 8, 128>}]} {
    %c0_i32 = arith.constant 0 : i32
    %0 = arith.cmpi eq, %arg1, %c0_i32 : i32
    %1 = arith.extui %0 : i1 to i32
    %c0_i32_0 = arith.constant 0 : i32
    %2 = arith.cmpi ne, %1, %c0_i32_0 : i32
    scf.if %2 {
      %cst_30 = arith.constant 0.000000e+00 : f32
      %56 = vector.broadcast %cst_30 : f32 to vector<2x8x128xf32>
      %c0_31 = arith.constant 0 : index
      %c0_32 = arith.constant 0 : index
      %c0_33 = arith.constant 0 : index
      %c0_34 = arith.constant 0 : index
      %57 = vector.load %arg5[%c0_31, %c0_32, %c0_33, %c0_34] : memref<1x2x8x128xf32, #tpu.memory_space<vmem>>, vector<1x2x8x128xf32>
      %58 = vector.shape_cast %57 : vector<1x2x8x128xf32> to vector<2x8x128xf32>
      %59 = vector.shape_cast %56 : vector<2x8x128xf32> to vector<1x2x8x128xf32>
      tpu.vector_store %arg5[%c0_31, %c0_32, %c0_33, %c0_34], %59 {strides = array<i32>} : memref<1x2x8x128xf32, #tpu.memory_space<vmem>>, vector<1x2x8x128xf32>,
    } else {
    }
    %c0 = arith.constant 0 : index
    %c0_1 = arith.constant 0 : index
    %3 = vector.load %arg4[%c0, %c0_1] : memref<8x128xf32, #tpu.memory_space<vmem>>, vector<8x128xf32>
    %c1_i32 = arith.constant 1 : i32
    %4 = arith.muli %arg0, %c1_i32 : i32
    %5 = arith.addi %4, %arg1 : i32
    %c8_i32 = arith.constant 8 : i32
    %6 = arith.muli %5, %c8_i32 : i32
    %7 = tpu.iota {dimensions = array<i32: 0>} : vector<8x128xi32>
    %8 = vector.broadcast %6 : i32 to vector<8x128xi32>
    %9 = arith.addi %7, %8 : vector<8x128xi32>
    %c4_i32 = arith.constant 4 : i32
    %10 = vector.broadcast %c4_i32 : i32 to vector<8x128xi32>
    %11 = arith.cmpi slt, %9, %10 : vector<8x128xi32>
    %c0_2 = arith.constant 0 : index
    %c0_3 = arith.constant 0 : index
    %12 = vector.load %arg2[%c0_2, %c0_3] : memref<8x128xf32, #tpu.memory_space<vmem>>, vector<8x128xf32>
    %13 = math.log %12 : vector<8x128xf32>
    %cst = arith.constant -1.000000e+02 : f32
    %14 = vector.broadcast %cst : f32 to vector<8x128xf32>
    %15 = arith.maximumf %13, %14 : vector<8x128xf32>
    %cst_4 = arith.constant 1.000000e+00 : f32
    %16 = vector.broadcast %cst_4 : f32 to vector<8x128xf32>
    %17 = arith.subf %16, %12 : vector<8x128xf32>
    %18 = math.log %17 : vector<8x128xf32>
    %cst_5 = arith.constant -1.000000e+02 : f32
    %19 = vector.broadcast %cst_5 : f32 to vector<8x128xf32>
    %20 = arith.maximumf %18, %19 : vector<8x128xf32>
    %21 = arith.subf %15, %20 : vector<8x128xf32>
    %22 = arith.mulf %3, %21 : vector<8x128xf32>
    %23 = arith.addf %22, %20 : vector<8x128xf32>
    %cst_6 = arith.constant 0.000000e+00 : f32
    %24 = vector.broadcast %cst_6 : f32 to vector<8x128xf32>
    %25 = arith.select %11, %23, %24 : vector<8x128xi1>, vector<8x128xf32>
    %c0_7 = arith.constant 0 : index
    %c0_8 = arith.constant 0 : index
    %c0_9 = arith.constant 0 : index
    %c0_10 = arith.constant 0 : index
    %26 = vector.load %arg5[%c0_7, %c0_8, %c0_9, %c0_10] : memref<1x2x8x128xf32, #tpu.memory_space<vmem>>, vector<1x1x8x128xf32>
    %27 = vector.shape_cast %26 : vector<1x1x8x128xf32> to vector<8x128xf32>
    %28 = vector.shape_cast %25 : vector<8x128xf32> to vector<1x8x128xf32>
    %cst_11 = arith.constant dense<0.000000e+00> : vector<8x128xf32>
    %29 = vector.multi_reduction <add>, %28, %cst_11 [0] : vector<1x8x128xf32> to vector<8x128xf32>
    %30 = arith.addf %27, %29 : vector<8x128xf32>
    %c0_12 = arith.constant 0 : index
    %c0_13 = arith.constant 0 : index
    %c0_14 = arith.constant 0 : index
    %c0_15 = arith.constant 0 : index
    %31 = vector.load %arg5[%c0_12, %c0_13, %c0_14, %c0_15] : memref<1x2x8x128xf32, #tpu.memory_space<vmem>>, vector<1x1x8x128xf32>
    %32 = vector.shape_cast %31 : vector<1x1x8x128xf32> to vector<8x128xf32>
    %33 = vector.shape_cast %30 : vector<8x128xf32> to vector<1x1x8x128xf32>
    tpu.vector_store %arg5[%c0_12, %c0_13, %c0_14, %c0_15], %33 {strides = array<i32>} : memref<1x2x8x128xf32, #tpu.memory_space<vmem>>, vector<1x1x8x128xf32>,
    %c0_16 = arith.constant 0 : index
    %c0_17 = arith.constant 0 : index
    %34 = vector.load %arg3[%c0_16, %c0_17] : memref<8x128xf32, #tpu.memory_space<vmem>>, vector<8x128xf32>
    %35 = math.log %34 : vector<8x128xf32>
    %cst_18 = arith.constant -1.000000e+02 : f32
    %36 = vector.broadcast %cst_18 : f32 to vector<8x128xf32>
    %37 = arith.maximumf %35, %36 : vector<8x128xf32>
    %cst_19 = arith.constant 1.000000e+00 : f32
    %38 = vector.broadcast %cst_19 : f32 to vector<8x128xf32>
    %39 = arith.subf %38, %34 : vector<8x128xf32>
    %40 = math.log %39 : vector<8x128xf32>
    %cst_20 = arith.constant -1.000000e+02 : f32
    %41 = vector.broadcast %cst_20 : f32 to vector<8x128xf32>
    %42 = arith.maximumf %40, %41 : vector<8x128xf32>
    %43 = arith.subf %37, %42 : vector<8x128xf32>
    %44 = arith.mulf %3, %43 : vector<8x128xf32>
    %45 = arith.addf %44, %42 : vector<8x128xf32>
    %cst_21 = arith.constant 0.000000e+00 : f32
    %46 = vector.broadcast %cst_21 : f32 to vector<8x128xf32>
    %47 = arith.select %11, %45, %46 : vector<8x128xi1>, vector<8x128xf32>
    %c0_22 = arith.constant 0 : index
    %c1 = arith.constant 1 : index
    %c0_23 = arith.constant 0 : index
    %c0_24 = arith.constant 0 : index
    %48 = vector.load %arg5[%c0_22, %c1, %c0_23, %c0_24] : memref<1x2x8x128xf32, #tpu.memory_space<vmem>>, vector<1x1x8x128xf32>
    %49 = vector.shape_cast %48 : vector<1x1x8x128xf32> to vector<8x128xf32>
    %50 = vector.shape_cast %47 : vector<8x128xf32> to vector<1x8x128xf32>
    %cst_25 = arith.constant dense<0.000000e+00> : vector<8x128xf32>
    %51 = vector.multi_reduction <add>, %50, %cst_25 [0] : vector<1x8x128xf32> to vector<8x128xf32>
    %52 = arith.addf %49, %51 : vector<8x128xf32>
    %c0_26 = arith.constant 0 : index
    %c1_27 = arith.constant 1 : index
    %c0_28 = arith.constant 0 : index
    %c0_29 = arith.constant 0 : index
    %53 = vector.load %arg5[%c0_26, %c1_27, %c0_28, %c0_29] : memref<1x2x8x128xf32, #tpu.memory_space<vmem>>, vector<1x1x8x128xf32>
    %54 = vector.shape_cast %53 : vector<1x1x8x128xf32> to vector<8x128xf32>
    %55 = vector.shape_cast %52 : vector<8x128xf32> to vector<1x1x8x128xf32>
    tpu.vector_store %arg5[%c0_26, %c1_27, %c0_28, %c0_29], %55 {strides = array<i32>} : memref<1x2x8x128xf32, #tpu.memory_space<vmem>>, vector<1x1x8x128xf32>,
    return
  }
  func.func @transform_0(%arg0: i32, %arg1: i32) -> (i32, i32) {
    %c1_i32 = arith.constant 1 : i32
    %0 = arith.muli %arg0, %c1_i32 : i32
    %1 = arith.addi %0, %arg1 : i32
    %c0_i32 = arith.constant 0 : i32
    %c0_i32_0 = arith.constant 0 : i32
    return %1, %c0_i32 : i32, i32
  }
  func.func @transform_1(%arg0: i32, %arg1: i32) -> (i32, i32) {
    %c1_i32 = arith.constant 1 : i32
    %0 = arith.muli %arg0, %c1_i32 : i32
    %1 = arith.addi %0, %arg1 : i32
    %c0_i32 = arith.constant 0 : i32
    %c0_i32_0 = arith.constant 0 : i32
    return %1, %c0_i32 : i32, i32
  }
  func.func @transform_2(%arg0: i32, %arg1: i32) -> (i32, i32) {
    %c1_i32 = arith.constant 1 : i32
    %0 = arith.muli %arg0, %c1_i32 : i32
    %1 = arith.addi %0, %arg1 : i32
    %c0_i32 = arith.constant 0 : i32
    %c0_i32_0 = arith.constant 0 : i32
    return %1, %c0_i32 : i32, i32
  }
  func.func @transform_3(%arg0: i32, %arg1: i32) -> (i32, i32, i32, i32) {
    %c0_i32 = arith.constant 0 : i32
    %c0_i32_0 = arith.constant 0 : i32
    %c0_i32_1 = arith.constant 0 : i32
    %c0_i32_2 = arith.constant 0 : i32
    return %arg0, %c0_i32, %c0_i32_0, %c0_i32_1 : i32, i32, i32, i32
  }
}

</mosaic_0001>

<llo_original>
// kernel: edge_bce_loss.2
$region0: #{edge_bce_loss.2}
  #allocation0 [shape = 'u32[]', space=smem, size = 0x4, offset = 0x4, fixed_abs, tag = 'smem constant byte address 0x4 - core index']
  #allocation1 [shape = 'u32[144,128]{1,0:T(1,128)}', space=vmem, size = 0x12000, scoped, tag = 'internal scratch']
  %s0 = inlined_call_operand.vmem [shape: f32[4,128], index: 0, kind: input, shape index: {}]
  %s1 = inlined_call_operand.vmem [shape: f32[4,128], index: 1, kind: input, shape index: {}]
  %s2 = inlined_call_operand.vmem [shape: f32[4,128], index: 2, kind: input, shape index: {}]
  %s3 = inlined_call_operand.vmem [shape: f32[1,2,8,128], index: 3, kind: output, shape index: {}]
  %s4 = sld [smem:[#allocation0]]
  $region26: #{edge_bce_loss.2} parent=0
    _
  %s6 = ssub.s32 1, %s4
  %s7 = scalar_select 0, %s6, %s4
  // Predicated region
  $region2: #{edge_bce_loss.2} parent=0 // pred_check
    _
  $region3: #{edge_bce_loss.2} parent=0 // pred_check_branch
    %9 = sbr.rel (0) target = $region5
  $region4: #{edge_bce_loss.2} parent=0 // pred_region
    %s10 = sadd.s32 0, 0
    %s11 = smul.u32 2, %s10
    %s12 = ssub.s32 1, %s11
    %s13 = smul.u32 64, %s12
    %p14 = scmp.lt.s32.totalorder %s11, 0
    %s15 = scalar_select %p14, %s11, 0
    %s16 = smul.addr %s15, 4
    %s17 = scalar_lea.vmem %s0, %s16
    %s18 = sadd.s32 0, 0
    %s19 = smul.u32 2, %s18
    %s20 = ssub.s32 1, %s19
    %s21 = smul.u32 64, %s20
  $region5: #{edge_bce_loss.2} parent=0 // pred_fallthru
    _
  // Predicated region
  $region6: #{edge_bce_loss.2} parent=0 // pred_check
    _
  $region7: #{edge_bce_loss.2} parent=0 // pred_check_branch
    %23 = sbr.rel (0) target = $region9
  $region8: #{edge_bce_loss.2} parent=0 // pred_region
    %s24 = sadd.s32 0, 0
    %s25 = smul.u32 2, %s24
    %s26 = ssub.s32 1, %s25
    %s27 = smul.u32 64, %s26
    %p28 = scmp.lt.s32.totalorder %s25, 0
    %s29 = scalar_select %p28, %s25, 0
    %s30 = smul.addr %s29, 4
    %s31 = scalar_lea.vmem %s1, %s30
    %s32 = sadd.s32 0, 0
    %s33 = smul.u32 2, %s32
    %s34 = ssub.s32 1, %s33
    %s35 = smul.u32 64, %s34
  $region9: #{edge_bce_loss.2} parent=0 // pred_fallthru
    _
  // Predicated region
  $region10: #{edge_bce_loss.2} parent=0 // pred_check
    _
  $region11: #{edge_bce_loss.2} parent=0 // pred_check_branch
    %37 = sbr.rel (0) target = $region13
  $region12: #{edge_bce_loss.2} parent=0 // pred_region
    %s38 = sadd.s32 0, 0
    %s39 = smul.u32 2, %s38
    %s40 = ssub.s32 1, %s39
    %s41 = smul.u32 64, %s40
    %p42 = scmp.lt.s32.totalorder %s39, 0
    %s43 = scalar_select %p42, %s39, 0
    %s44 = smul.addr %s43, 4
    %s45 = scalar_lea.vmem %s2, %s44
    %s46 = sadd.s32 0, 0
    %s47 = smul.u32 2, %s46
    %s48 = ssub.s32 1, %s47
    %s49 = smul.u32 64, %s48
  $region13: #{edge_bce_loss.2} parent=0 // pred_fallthru
    _
  %s50 = sadd.s32 0, 0
  %s51 = smul.u32 2, %s50
  %s52 = ssub.s32 1, %s51
  %s53 = smul.u32 64, %s52
  %p54 = scmp.lt.s32.totalorder %s51, 0
  %s55 = scalar_select %p54, %s51, 0
  %s56 = smul.addr %s55, 4
  %s57 = scalar_lea.vmem %s0, %s56
  %s58 = sadd.s32 0, 0
  %s59 = smul.u32 2, %s58
  %s60 = ssub.s32 1, %s59
  %s61 = smul.u32 64, %s60
  %p62 = scmp.lt.s32.totalorder %s59, 0
  %s63 = scalar_select %p62, %s59, 0
  %s64 = smul.addr %s63, 4
  %s65 = scalar_lea.vmem %s1, %s64
  %s66 = sadd.s32 0, 0
  %s67 = smul.u32 2, %s66
  %s68 = ssub.s32 1, %s67
  %s69 = smul.u32 64, %s68
  %p70 = scmp.lt.s32.totalorder %s67, 0
  %s71 = scalar_select %p70, %s67, 0
  %s72 = smul.addr %s71, 4
  %s73 = scalar_lea.vmem %s2, %s72
  %s74 = sadd.s32 0, 0
  %s75 = smul.u32 2, %s74
  %s76 = ssub.s32 1, %s75
  %s77 = smul.u32 64, %s76
  %p78 = scmp.lt.s32.totalorder %s75, 0
  %s79 = scalar_select %p78, %s75, 0
  %s80 = smul.addr %s79, 4
  %s81 = scalar_lea.vmem %s0, %s80
  %s82 = sadd.s32 0, 0
  %s83 = smul.u32 2, %s82
  %s84 = ssub.s32 1, %s83
  %s85 = smul.u32 64, %s84
  %s86 = sadd.s32 0, 0
  %s87 = smul.u32 2, %s86
  %s88 = ssub.s32 1, %s87
  %s89 = smul.u32 64, %s88
  %p90 = scmp.lt.s32.totalorder %s87, 0
  %s91 = scalar_select %p90, %s87, 0
  %s92 = smul.addr %s91, 4
  %s93 = scalar_lea.vmem %s1, %s92
  %s94 = sadd.s32 0, 0
  %s95 = smul.u32 2, %s94
  %s96 = ssub.s32 1, %s95
  %s97 = smul.u32 64, %s96
  %s98 = sadd.s32 0, 0
  %s99 = smul.u32 2, %s98
  %s100 = ssub.s32 1, %s99
  %s101 = smul.u32 64, %s100
  %p102 = scmp.lt.s32.totalorder %s99, 0
  %s103 = scalar_select %p102, %s99, 0
  %s104 = smul.addr %s103, 4
  %s105 = scalar_lea.vmem %s2, %s104
  %s106 = sadd.s32 0, 0
  %s107 = smul.u32 2, %s106
  %s108 = ssub.s32 1, %s107
  %s109 = smul.u32 64, %s108
  %p110 = scmp.eq.s32.totalorder 0, 0
  // Predicated region
  $region14: #{edge_bce_loss.2} parent=0 // pred_check
    %p111 = pneg %p110
  $region15: #{edge_bce_loss.2} parent=0 // pred_check_branch
    %113 = sbr.rel (%p111) target = $region17
  $region16: #{edge_bce_loss.2} parent=0 // pred_region
    %114 = vst [vmem:[%s3] sm:$0xff] 0.0
    %115 = vst [vmem:[%s3 + $0x8] sm:$0xff] 0.0
  $region17: #{edge_bce_loss.2} parent=0 // pred_fallthru
    _
  %v116 = vld [vmem:[%s105] sm:$0xff]
  %s117 = sadd.s32 0, 0
  %s118 = smul.u32 %s117, 8
  %v119 = vlaneseq
  %v120 = vshrl.u32 %v119, 7
  %v121 = vstv %s118
  %v122 = vadd.s32 %v120, %v121
  %vm123 = vcmp.lt.s32.totalorder %v122, 4
  %v124 = vld [vmem:[%s81] sm:$0xff]
  %v125 = vlog2.pop %v124
  %v126 = vmul.f32 %v125, 0.6931472
  %v127 = vmax.f32 %v126, -100.0
  %v128 = vsub.f32 1.0, %v124
  %v129 = vlog2.pop %v128
  %v130 = vmul.f32 %v129, 0.6931472
  %v131 = vmax.f32 %v130, -100.0
  %v132 = vsub.f32 %v127, %v131
  %v133 = vmul.f32 %v116, %v132
  %v134 = vadd.f32 %v133, %v131
  %v135 = vsel %vm123, %v134, 0.0
  %v136 = vld [vmem:[%s3] sm:$0xff]
  %v137 = vadd.f32 %v135, 0.0
  %v138 = vadd.f32 %v136, %v137
  %139 = vst [vmem:[%s3] sm:$0xff] %v138
  %v140 = vld [vmem:[%s93] sm:$0xff]
  %v141 = vlog2.pop %v140
  %v142 = vmul.f32 %v141, 0.6931472
  %v143 = vmax.f32 %v142, -100.0
  %v144 = vsub.f32 1.0, %v140
  %v145 = vlog2.pop %v144
  %v146 = vmul.f32 %v145, 0.6931472
  %v147 = vmax.f32 %v146, -100.0
  %v148 = vsub.f32 %v143, %v147
  %v149 = vmul.f32 %v116, %v148
  %v150 = vadd.f32 %v149, %v147
  %v151 = vsel %vm123, %v150, 0.0
  %s152 = scalar_lea.vmem %s3, 8
  %v153 = vld [vmem:[%s152] sm:$0xff]
  %v154 = vadd.f32 %v151, 0.0
  %v155 = vadd.f32 %v153, %v154
  %156 = vst [vmem:[%s152] sm:$0xff] %v155
  // Predicated region
  $region18: #{edge_bce_loss.2} parent=0 // pred_check
    _
  $region19: #{edge_bce_loss.2} parent=0 // pred_check_branch
    %158 = sbr.rel (0) target = $region21
  $region20: #{edge_bce_loss.2} parent=0 // pred_region
    _
  $region21: #{edge_bce_loss.2} parent=0 // pred_fallthru
    _
  // Predicated region
  $region22: #{edge_bce_loss.2} parent=0 // pred_check
    _
  $region23: #{edge_bce_loss.2} parent=0 // pred_check_branch
    %160 = sbr.rel (0) target = $region25
  $region24: #{edge_bce_loss.2} parent=0 // pred_region
    _
  $region25: #{edge_bce_loss.2} parent=0 // pred_fallthru
    _

// kernel: edge_bce_loss.3
$region0: #{edge_bce_loss.3}
  #allocation0 [shape = 'u32[]', space=smem, size = 0x4, offset = 0x4, fixed_abs, tag = 'smem constant byte address 0x4 - core index']
  #allocation1 [shape = 'u32[144,128]{1,0:T(1,128)}', space=vmem, size = 0x12000, scoped, tag = 'internal scratch']
  %s0 = inlined_call_operand.vmem [shape: f32[16,8], index: 0, kind: input, shape index: {}]
  %s1 = inlined_call_operand.vmem [shape: f32[16,8], index: 1, kind: input, shape index: {}]
  %s2 = inlined_call_operand.vmem [shape: f32[8,4], index: 2, kind: input, shape index: {}]
  %s3 = inlined_call_operand.vmem [shape: f32[8,4], index: 3, kind: input, shape index: {}]
  %s4 = inlined_call_operand.vmem [shape: f32[4,2], index: 4, kind: input, shape index: {}]
  %s5 = inlined_call_operand.vmem [shape: f32[4,2], index: 5, kind: input, shape index: {}]
  %s6 = inlined_call_operand.vmem [shape: f32[2,1], index: 6, kind: input, shape index: {}]
  %s7 = inlined_call_operand.vmem [shape: f32[2,1], index: 7, kind: input, shape index: {}]
  %s8 = inlined_call_operand.vmem [shape: f32[4,8,128], index: 8, kind: output, shape index: {}]
  %s9 = sld [smem:[#allocation0]]
  $region42: #{edge_bce_loss.3} parent=0
    _
  %s11 = ssub.s32 1, %s9
  %s12 = scalar_select 0, %s11, %s9
  // Predicated region
  $region2: #{edge_bce_loss.3} parent=0 // pred_check
    _
  $region3: #{edge_bce_loss.3} parent=0 // pred_check_branch
    %14 = sbr.rel (0) target = $region5
  $region4: #{edge_bce_loss.3} parent=0 // pred_region
    _
  $region5: #{edge_bce_loss.3} parent=0 // pred_fallthru
    _
  // Predicated region
  $region6: #{edge_bce_loss.3} parent=0 // pred_check
    _
  $region7: #{edge_bce_loss.3} parent=0 // pred_check_branch
    %16 = sbr.rel (0) target = $region9
  $region8: #{edge_bce_loss.3} parent=0 // pred_region
    _
  $region9: #{edge_bce_loss.3} parent=0 // pred_fallthru
    _
  // Predicated region
  $region10: #{edge_bce_loss.3} parent=0 // pred_check
    _
  $region11: #{edge_bce_loss.3} parent=0 // pred_check_branch
    %18 = sbr.rel (0) target = $region13
  $region12: #{edge_bce_loss.3} parent=0 // pred_region
    _
  $region13: #{edge_bce_loss.3} parent=0 // pred_fallthru
    _
  // Predicated region
  $region14: #{edge_bce_loss.3} parent=0 // pred_check
    _
  $region15: #{edge_bce_loss.3} parent=0 // pred_check_branch
    %20 = sbr.rel (0) target = $region17
  $region16: #{edge_bce_loss.3} parent=0 // pred_region
    _
  $region17: #{edge_bce_loss.3} parent=0 // pred_fallthru
    _
  // Predicated region
  $region18: #{edge_bce_loss.3} parent=0 // pred_check
    _
  $region19: #{edge_bce_loss.3} parent=0 // pred_check_branch
    %22 = sbr.rel (0) target = $region21
  $region20: #{edge_bce_loss.3} parent=0 // pred_region
    _
  $region21: #{edge_bce_loss.3} parent=0 // pred_fallthru
    _
  // Predicated region
  $region22: #{edge_bce_loss.3} parent=0 // pred_check
    _
  $region23: #{edge_bce_loss.3} parent=0 // pred_check_branch
    %24 = sbr.rel (0) target = $region25
  $region24: #{edge_bce_loss.3} parent=0 // pred_region
    _
  $region25: #{edge_bce_loss.3} parent=0 // pred_fallthru
    _
  // Predicated region
  $region26: #{edge_bce_loss.3} parent=0 // pred_check
    _
  $region27: #{edge_bce_loss.3} parent=0 // pred_check_branch
    %26 = sbr.rel (0) target = $region29
  $region28: #{edge_bce_loss.3} parent=0 // pred_region
    _
  $region29: #{edge_bce_loss.3} parent=0 // pred_fallthru
    _
  // Predicated region
  $region30: #{edge_bce_loss.3} parent=0 // pred_check
    _
  $region31: #{edge_bce_loss.3} parent=0 // pred_check_branch
    %28 = sbr.rel (0) target = $region33
  $region32: #{edge_bce_loss.3} parent=0 // pred_region
    _
  $region33: #{edge_bce_loss.3} parent=0 // pred_fallthru
    _
  %v29 = vld [vmem:[%s0] sm:$0xff]
  %v30 = vld [vmem:[%s0 + $0x8] sm:$0xff]
  %v31 = vld [vmem:[%s1] sm:$0xff]
  %v32 = vld [vmem:[%s1 + $0x8] sm:$0xff]
  %v33 = vlog2.pop %v29
  %v34 = vmul.f32 %v33, 0.6931472
  %v35 = vlog2.pop %v30
  %v36 = vmul.f32 %v35, 0.6931472
  %v37 = vmax.f32 %v34, -100.0
  %v38 = vmax.f32 %v36, -100.0
  %v39 = vsub.f32 1.0, %v29
  %v40 = vsub.f32 1.0, %v30
  %v41 = vlog2.pop %v39
  %v42 = vmul.f32 %v41, 0.6931472
  %v43 = vlog2.pop %v40
  %v44 = vmul.f32 %v43, 0.6931472
  %v45 = vmax.f32 %v42, -100.0
  %v46 = vmax.f32 %v44, -100.0
  %v47 = vsub.f32 %v37, %v45
  %v48 = vsub.f32 %v38, %v46
  %v49 = vmul.f32 %v31, %v47
  %v50 = vmul.f32 %v32, %v48
  %v51 = vadd.f32 %v49, %v45
  %v52 = vadd.f32 %v50, %v46
  %vm53 = vcmask 64512
  %v54 = vsel %vm53, %v51, 0.0
  %55 = vadd.xlane.f32.xlu0 %v54
  %v56 = vpop.xlane.xlu0 %55
  %v57 = vsel %vm53, %v52, 0.0
  %58 = vadd.xlane.f32.xlu0 %v57
  %v59 = vpop.xlane.xlu0 %58
  %v60 = vadd.f32 %v56, %v59
  %v61 = vrot.slane %v60, 4
  %v62 = vadd.f32 %v60, %v61
  %v63 = vrot.slane %v62, 2
  %v64 = vadd.f32 %v62, %v63
  %v65 = vrot.slane %v64, 1
  %v66 = vadd.f32 %v64, %v65
  %67 = vst [vmem:[%s8] sm:$0xff] %v66
  %v68 = vld [vmem:[%s2] sm:$0xff]
  %v69 = vld [vmem:[%s3] sm:$0xff]
  %v70 = vlog2.pop %v68
  %v71 = vmul.f32 %v70, 0.6931472
  %v72 = vmax.f32 %v71, -100.0
  %v73 = vsub.f32 1.0, %v68
  %v74 = vlog2.pop %v73
  %v75 = vmul.f32 %v74, 0.6931472
  %v76 = vmax.f32 %v75, -100.0
  %v77 = vsub.f32 %v72, %v76
  %v78 = vmul.f32 %v69, %v77
  %v79 = vadd.f32 %v78, %v76
  %vm80 = vcmask 31744
  %v81 = vsel %vm80, %v79, 0.0
  %82 = vadd.xlane.f32.xlu0 %v81
  %v83 = vpop.xlane.xlu0 %82
  %v84 = vrot.slane %v83, 4
  %v85 = vadd.f32 %v83, %v84
  %v86 = vrot.slane %v85, 2
  %v87 = vadd.f32 %v85, %v86
  %v88 = vrot.slane %v87, 1
  %v89 = vadd.f32 %v87, %v88
  %s90 = scalar_lea.vmem %s8, 8
  %91 = vst [vmem:[%s90] sm:$0xff] %v89
  %v92 = vld [vmem:[%s4] sm:$0xf]
  %v93 = vld [vmem:[%s5] sm:$0xf]
  %v94 = vlog2.pop %v92
  %v95 = vmul.f32 %v94, 0.6931472
  %v96 = vmax.f32 %v95, -100.0
  %v97 = vsub.f32 1.0, %v92
  %v98 = vlog2.pop %v97
  %v99 = vmul.f32 %v98, 0.6931472
  %v100 = vmax.f32 %v99, -100.0
  %v101 = vsub.f32 %v96, %v100
  %v102 = vmul.f32 %v93, %v101
  %v103 = vadd.f32 %v102, %v100
  %vm104 = vcmask 11264
  %v105 = vsel %vm104, %v103, 0.0
  %106 = vadd.xlane.f32.xlu0 %v105
  %v107 = vpop.xlane.xlu0 %106
  %vm108 = vcmask 1043456
  %v109 = vsel %vm108, %v107, 0.0
  %v110 = vrot.slane %v109, 4
  %v111 = vadd.f32 %v109, %v110
  %v112 = vrot.slane %v111, 2
  %v113 = vadd.f32 %v111, %v112
  %v114 = vrot.slane %v113, 1
  %v115 = vadd.f32 %v113, %v114
  %s116 = scalar_lea.vmem %s8, 16
  %117 = vst [vmem:[%s116] sm:$0xff] %v115
  %v118 = vld [vmem:[%s6] sm:$0x3]
  %v119 = vld [vmem:[%s7] sm:$0x3]
  %v120 = vlog2.pop %v118
  %v121 = vmul.f32 %v120, 0.6931472
  %v122 = vmax.f32 %v121, -100.0
  %v123 = vsub.f32 1.0, %v118
  %v124 = vlog2.pop %v123
  %v125 = vmul.f32 %v124, 0.6931472
  %v126 = vmax.f32 %v125, -100.0
  %v127 = vsub.f32 %v122, %v126
  %v128 = vmul.f32 %v119, %v127
  %v129 = vadd.f32 %v128, %v126
  %v130 = vadd.f32 %v129, 0.0
  %vm131 = vcmask 1024
  %v132 = vsel %vm131, %v130, 0.0
  %v133 = vrot.slane %v132, 4
  %v134 = vadd.f32 %v132, %v133
  %v135 = vrot.slane %v134, 2
  %v136 = vadd.f32 %v134, %v135
  %v137 = vrot.slane %v136, 1
  %v138 = vadd.f32 %v136, %v137
  %140 = vset.pattern.permute.xlu0 0
  %141 = vperm.xlu0 %140, %v138
  %v142 = vpop.permute.xlu0 %141
  %s144 = scalar_lea.vmem %s8, 24
  %145 = vst [vmem:[%s144] sm:$0xff] %v142
  // Predicated region
  $region34: #{edge_bce_loss.3} parent=0 // pred_check
    _
  $region35: #{edge_bce_loss.3} parent=0 // pred_check_branch
    %147 = sbr.rel (0) target = $region37
  $region36: #{edge_bce_loss.3} parent=0 // pred_region
    _
  $region37: #{edge_bce_loss.3} parent=0 // pred_fallthru
    _
  // Predicated region
  $region38: #{edge_bce_loss.3} parent=0 // pred_check
    _
  $region39: #{edge_bce_loss.3} parent=0 // pred_check_branch
    %149 = sbr.rel (0) target = $region41
  $region40: #{edge_bce_loss.3} parent=0 // pred_region
    _
  $region41: #{edge_bce_loss.3} parent=0 // pred_fallthru
    _

</llo_original>
